<compile_context>
chip_gen: v6e
topology: v6e:2x2x1
jax: 0.10.0
libtpu: 0.0.40
codegen_flags: <defaults>
</compile_context>

<pallas_src>
import jax
import jax.numpy as jnp
from jax.experimental import pallas as pl
from jax.experimental.pallas import tpu as pltpu

HIDDEN = 400       # logical hidden width (matches the PyTorch module)
HIDDEN_PAD = 512   # padded hidden width used inside the kernel


def _round_up(x, m):
    return ((x + m - 1) // m) * m


def _actor_kernel(ma_ref, x_ref, w1_ref, b1_ref, w2_ref, b2_ref,
                  w3_ref, b3_ref, o_ref):
    # x tile: (TB, S) f32 -> bf16 so all three matmuls use the bf16 MXU path,
    # accumulating in f32.
    x = x_ref[...].astype(jnp.bfloat16)

    h1 = jnp.dot(x, w1_ref[...], preferred_element_type=jnp.float32) + b1_ref[...]
    h1 = jnp.maximum(h1, 0.0).astype(jnp.bfloat16)                    # (TB, 512)

    h2 = jnp.dot(h1, w2_ref[...], preferred_element_type=jnp.float32) + b2_ref[...]
    h2 = jnp.maximum(h2, 0.0).astype(jnp.bfloat16)                    # (TB, 512)

    h3 = jnp.dot(h2, w3_ref[...], preferred_element_type=jnp.float32) + b3_ref[...]
    o_ref[...] = (ma_ref[0, 0] * jnp.tanh(h3)).astype(o_ref.dtype)    # (TB, A)


def pack_actor_params(params, hidden_pad=HIDDEN_PAD, weight_dtype=jnp.bfloat16):
    """Zero-pad hidden 400->512 (exact under relu) and cast weights to bf16.

    Biases stay f32; padding columns get zero weight AND zero bias, so the padded
    hidden units are exactly zero after relu and contribute nothing downstream.
    """
    H = params["w1"].shape[1]
    ph = hidden_pad - H
    return dict(
        w1=jnp.pad(params["w1"], ((0, 0), (0, ph))).astype(weight_dtype),
        b1=jnp.pad(params["b1"], ((0, 0), (0, ph))).astype(jnp.float32),
        w2=jnp.pad(params["w2"], ((0, ph), (0, ph))).astype(weight_dtype),
        b2=jnp.pad(params["b2"], ((0, 0), (0, ph))).astype(jnp.float32),
        w3=jnp.pad(params["w3"], ((0, ph), (0, 0))).astype(weight_dtype),
        b3=params["b3"].astype(jnp.float32),
    )


def actor_forward(state, packed_params, max_action, *, batch_tile=256):
    """state: (B, state_dim) f32.  packed_params: output of pack_actor_params."""
    B, S = state.shape
    H = packed_params["w1"].shape[1]
    A = packed_params["w3"].shape[1]

    # Tile over the batch; weights stay resident, activations are pipelined.
    TB = min(batch_tile, _round_up(B, 8))
    B_pad = _round_up(B, TB)
    if B_pad != B:
        state = jnp.pad(state, ((0, B_pad - B), (0, 0)))
    grid = (B_pad // TB,)

    ma = jnp.asarray(max_action, jnp.float32).reshape(1, 1)   # SMEM scalar

    out = pl.pallas_call(
        _actor_kernel,
        out_shape=jax.ShapeDtypeStruct((B_pad, A), jnp.float32),
        grid=grid,
        in_specs=[
            pl.BlockSpec((1, 1), lambda i: (0, 0),
                         memory_space=pltpu.MemorySpace.SMEM),      # max_action
            pl.BlockSpec((TB, S), lambda i: (i, 0)),                # state tile
            pl.BlockSpec((S, H), lambda i: (0, 0)),                 # w1 (resident)
            pl.BlockSpec((1, H), lambda i: (0, 0)),                 # b1
            pl.BlockSpec((H, H), lambda i: (0, 0)),                 # w2
            pl.BlockSpec((1, H), lambda i: (0, 0)),                 # b2
            pl.BlockSpec((H, A), lambda i: (0, 0)),                 # w3
            pl.BlockSpec((1, A), lambda i: (0, 0)),                 # b3
        ],
        out_specs=pl.BlockSpec((TB, A), lambda i: (i, 0)),
        compiler_params=pltpu.CompilerParams(
            dimension_semantics=("parallel",),            # shard batch tiles (v7x 2 TCs)
            vmem_limit_bytes=32 * 1024 * 1024,            # weights ~0.55 MiB + act tiles
        ),
    )(ma, state, packed_params["w1"], packed_params["b1"],
      packed_params["w2"], packed_params["b2"],
      packed_params["w3"], packed_params["b3"])

    return out[:B]


def init_actor_params(key, state_dim, action_dim):
    """Deterministic init mimicking nn.Linear's U(-1/sqrt(fan_in), 1/sqrt(fan_in))."""
    def linear(k, fan_in, fan_out):
        kw, kb = jax.random.split(k)
        bound = 1.0 / jnp.sqrt(fan_in)
        w = jax.random.uniform(kw, (fan_in, fan_out), jnp.float32, -bound, bound)
        b = jax.random.uniform(kb, (1, fan_out), jnp.float32, -bound, bound)
        return w, b

    k1, k2, k3 = jax.random.split(key, 3)
    w1, b1 = linear(k1, state_dim, HIDDEN)
    w2, b2 = linear(k2, HIDDEN, HIDDEN)
    w3, b3 = linear(k3, HIDDEN, action_dim)
    return dict(w1=w1, b1=b1, w2=w2, b2=b2, w3=w3, b3=b3)


def actor_reference(state, params, max_action):
    """Pure-JAX f32 reference matching the PyTorch module."""
    h1 = jnp.maximum(state @ params["w1"] + params["b1"], 0.0)
    h2 = jnp.maximum(h1 @ params["w2"] + params["b2"], 0.0)
    return max_action * jnp.tanh(h2 @ params["w3"] + params["b3"])


if __name__ == "__main__":
    key = jax.random.PRNGKey(0)
    k_params, k_state = jax.random.split(key)

    batch, state_dim, action_dim, max_action = 2, 16, 8, 2.0
    params = init_actor_params(k_params, state_dim, action_dim)
    packed = pack_actor_params(params)                 # pad 400->512, bf16 weights
    state = jax.random.normal(k_state, (batch, state_dim), jnp.float32)

    out = actor_forward(state, packed, max_action)
    out = jax.block_until_ready(out)

    ref = actor_reference(state, params, max_action)
    assert out.shape == (batch, action_dim)
    # bf16 weights (f32 accumulation) vs. full-f32 reference -> loosened tolerance.
    assert jnp.allclose(out, ref, atol=5e-2, rtol=5e-2), "mismatch vs pure-JAX reference"

    print("KERNEL_OK")
</pallas_src>

<mosaic_0001>
module attributes {stable_mosaic.version = 11 : i64} {
  func.func @_actor_kernel(%arg0: i32, %arg1: memref<1x1xf32, #tpu.memory_space<smem>>, %arg2: memref<8x16xf32, #tpu.memory_space<vmem>>, %arg3: memref<16x512xbf16, #tpu.memory_space<vmem>>, %arg4: memref<1x512xf32, #tpu.memory_space<vmem>>, %arg5: memref<512x512xbf16, #tpu.memory_space<vmem>>, %arg6: memref<1x512xf32, #tpu.memory_space<vmem>>, %arg7: memref<512x8xbf16, #tpu.memory_space<vmem>>, %arg8: memref<1x8xf32, #tpu.memory_space<vmem>>, %arg9: memref<8x8xf32, #tpu.memory_space<vmem>>) attributes {dimension_semantics = [#tpu.dimension_semantics<parallel>], iteration_bounds = array<i64: 1>, scalar_prefetch = 0 : i64, scratch_operands = 0 : i64, tpu.core_type = #tpu.core_type<tc>, window_params = [{transform_indices = @transform_0, window_bounds = array<i64: 1, 1>}, {transform_indices = @transform_1, window_bounds = array<i64: 8, 16>}, {pipeline_mode = #tpu.pipeline_mode<synchronous>, transform_indices = @transform_2, window_bounds = array<i64: 16, 512>}, {pipeline_mode = #tpu.pipeline_mode<synchronous>, transform_indices = @transform_3, window_bounds = array<i64: 1, 512>}, {pipeline_mode = #tpu.pipeline_mode<synchronous>, transform_indices = @transform_4, window_bounds = array<i64: 512, 512>}, {pipeline_mode = #tpu.pipeline_mode<synchronous>, transform_indices = @transform_5, window_bounds = array<i64: 1, 512>}, {pipeline_mode = #tpu.pipeline_mode<synchronous>, transform_indices = @transform_6, window_bounds = array<i64: 512, 8>}, {pipeline_mode = #tpu.pipeline_mode<synchronous>, transform_indices = @transform_7, window_bounds = array<i64: 1, 8>}, {transform_indices = @transform_8, window_bounds = array<i64: 8, 8>}]} {
    %c0 = arith.constant 0 : index
    %c0_0 = arith.constant 0 : index
    %0 = vector.load %arg2[%c0, %c0_0] : memref<8x16xf32, #tpu.memory_space<vmem>>, vector<8x16xf32>
    %1 = arith.truncf %0 : vector<8x16xf32> to vector<8x16xbf16>
    %c0_1 = arith.constant 0 : index
    %c0_2 = arith.constant 0 : index
    %2 = vector.load %arg3[%c0_1, %c0_2] : memref<16x512xbf16, #tpu.memory_space<vmem>>, vector<16x512xbf16>
    %cst = arith.constant dense<0.000000e+00> : vector<8x512xf32>
    %3 = tpu.matmul %1, %2, %cst {dimension_numbers = #tpu.dot_dimension_numbers<[1], [0], [0], [1], [0, 0, 1, 1], [], []>} : vector<8x16xbf16>, vector<16x512xbf16>, vector<8x512xf32> -> vector<8x512xf32>
    %c0_3 = arith.constant 0 : index
    %c0_4 = arith.constant 0 : index
    %4 = vector.load %arg4[%c0_3, %c0_4] : memref<1x512xf32, #tpu.memory_space<vmem>>, vector<1x512xf32>
    %5 = vector.broadcast %4 : vector<1x512xf32> to vector<8x512xf32>
    %6 = arith.addf %3, %5 : vector<8x512xf32>
    %cst_5 = arith.constant 0.000000e+00 : f32
    %7 = vector.broadcast %cst_5 : f32 to vector<8x512xf32>
    %8 = arith.maximumf %6, %7 : vector<8x512xf32>
    %9 = arith.truncf %8 : vector<8x512xf32> to vector<8x512xbf16>
    %c0_6 = arith.constant 0 : index
    %c0_7 = arith.constant 0 : index
    %10 = vector.load %arg5[%c0_6, %c0_7] : memref<512x512xbf16, #tpu.memory_space<vmem>>, vector<512x512xbf16>
    %cst_8 = arith.constant dense<0.000000e+00> : vector<8x512xf32>
    %11 = tpu.matmul %9, %10, %cst_8 {dimension_numbers = #tpu.dot_dimension_numbers<[1], [0], [0], [1], [0, 0, 1, 1], [], []>} : vector<8x512xbf16>, vector<512x512xbf16>, vector<8x512xf32> -> vector<8x512xf32>
    %c0_9 = arith.constant 0 : index
    %c0_10 = arith.constant 0 : index
    %12 = vector.load %arg6[%c0_9, %c0_10] : memref<1x512xf32, #tpu.memory_space<vmem>>, vector<1x512xf32>
    %13 = vector.broadcast %12 : vector<1x512xf32> to vector<8x512xf32>
    %14 = arith.addf %11, %13 : vector<8x512xf32>
    %cst_11 = arith.constant 0.000000e+00 : f32
    %15 = vector.broadcast %cst_11 : f32 to vector<8x512xf32>
    %16 = arith.maximumf %14, %15 : vector<8x512xf32>
    %17 = arith.truncf %16 : vector<8x512xf32> to vector<8x512xbf16>
    %c0_12 = arith.constant 0 : index
    %c0_13 = arith.constant 0 : index
    %18 = vector.load %arg7[%c0_12, %c0_13] : memref<512x8xbf16, #tpu.memory_space<vmem>>, vector<512x8xbf16>
    %cst_14 = arith.constant dense<0.000000e+00> : vector<8x8xf32>
    %19 = tpu.matmul %17, %18, %cst_14 {dimension_numbers = #tpu.dot_dimension_numbers<[1], [0], [0], [1], [0, 0, 1, 1], [], []>} : vector<8x512xbf16>, vector<512x8xbf16>, vector<8x8xf32> -> vector<8x8xf32>
    %c0_15 = arith.constant 0 : index
    %c0_16 = arith.constant 0 : index
    %20 = vector.load %arg8[%c0_15, %c0_16] : memref<1x8xf32, #tpu.memory_space<vmem>>, vector<1x8xf32>
    %21 = vector.broadcast %20 : vector<1x8xf32> to vector<8x8xf32>
    %22 = arith.addf %19, %21 : vector<8x8xf32>
    %c0_17 = arith.constant 0 : index
    %c0_18 = arith.constant 0 : index
    %23 = memref.load %arg1[%c0_17, %c0_18] : memref<1x1xf32, #tpu.memory_space<smem>>
    %24 = math.tanh %22 : vector<8x8xf32>
    %25 = vector.broadcast %23 : f32 to vector<8x8xf32>
    %26 = arith.mulf %25, %24 : vector<8x8xf32>
    %c0_19 = arith.constant 0 : index
    %c0_20 = arith.constant 0 : index
    %27 = vector.load %arg9[%c0_19, %c0_20] : memref<8x8xf32, #tpu.memory_space<vmem>>, vector<8x8xf32>
    tpu.vector_store %arg9[%c0_19, %c0_20], %26 {strides = array<i32>} : memref<8x8xf32, #tpu.memory_space<vmem>>, vector<8x8xf32>,
    return
  }
  func.func @transform_0(%arg0: i32) -> (i32, i32) {
    %c0_i32 = arith.constant 0 : i32
    %c0_i32_0 = arith.constant 0 : i32
    %c0_i32_1 = arith.constant 0 : i32
    return %c0_i32, %c0_i32_0 : i32, i32
  }
  func.func @transform_1(%arg0: i32) -> (i32, i32) {
    %c0_i32 = arith.constant 0 : i32
    %c0_i32_0 = arith.constant 0 : i32
    return %arg0, %c0_i32 : i32, i32
  }
  func.func @transform_2(%arg0: i32) -> (i32, i32) {
    %c0_i32 = arith.constant 0 : i32
    %c0_i32_0 = arith.constant 0 : i32
    %c0_i32_1 = arith.constant 0 : i32
    return %c0_i32, %c0_i32_0 : i32, i32
  }
  func.func @transform_3(%arg0: i32) -> (i32, i32) {
    %c0_i32 = arith.constant 0 : i32
    %c0_i32_0 = arith.constant 0 : i32
    %c0_i32_1 = arith.constant 0 : i32
    return %c0_i32, %c0_i32_0 : i32, i32
  }
  func.func @transform_4(%arg0: i32) -> (i32, i32) {
    %c0_i32 = arith.constant 0 : i32
    %c0_i32_0 = arith.constant 0 : i32
    %c0_i32_1 = arith.constant 0 : i32
    return %c0_i32, %c0_i32_0 : i32, i32
  }
  func.func @transform_5(%arg0: i32) -> (i32, i32) {
    %c0_i32 = arith.constant 0 : i32
    %c0_i32_0 = arith.constant 0 : i32
    %c0_i32_1 = arith.constant 0 : i32
    return %c0_i32, %c0_i32_0 : i32, i32
  }
  func.func @transform_6(%arg0: i32) -> (i32, i32) {
    %c0_i32 = arith.constant 0 : i32
    %c0_i32_0 = arith.constant 0 : i32
    %c0_i32_1 = arith.constant 0 : i32
    return %c0_i32, %c0_i32_0 : i32, i32
  }
  func.func @transform_7(%arg0: i32) -> (i32, i32) {
    %c0_i32 = arith.constant 0 : i32
    %c0_i32_0 = arith.constant 0 : i32
    %c0_i32_1 = arith.constant 0 : i32
    return %c0_i32, %c0_i32_0 : i32, i32
  }
  func.func @transform_8(%arg0: i32) -> (i32, i32) {
    %c0_i32 = arith.constant 0 : i32
    %c0_i32_0 = arith.constant 0 : i32
    return %arg0, %c0_i32 : i32, i32
  }
}

</mosaic_0001>

<llo_original>
// kernel: tpu_custom_call.1
$region0: #{tpu_custom_call.1}
  #allocation0 [shape = 'u32[]', space=smem, size = 0x4, offset = 0x4, fixed_abs, tag = 'smem constant byte address 0x4 - core index']
  #allocation1 [shape = 'u32[144,128]{1,0:T(1,128)}', space=vmem, size = 0x12000, scoped, tag = 'internal scratch']
  #allocation2 [shape = 'f32[1,1]{1,0:T(1,128)S(6)}', space=smem, size = 0x200, scoped, tag = 'scoped memory for tpu_custom_call.1']
  %s0 = inlined_call_operand.<no memory space> [shape: f32[1,1], index: 0, kind: input, shape index: {}]
  %s1 = inlined_call_operand.vmem [shape: f32[8,16], index: 1, kind: input, shape index: {}]
  %s2 = inlined_call_operand.vmem [shape: bf16[16,512], index: 2, kind: input, shape index: {}]
  %s3 = inlined_call_operand.vmem [shape: f32[1,512], index: 3, kind: input, shape index: {}]
  %s4 = inlined_call_operand.hbm [shape: bf16[512,512], index: 4, kind: input, shape index: {}]
  %s5 = inlined_call_operand.vmem [shape: f32[1,512], index: 5, kind: input, shape index: {}]
  %s6 = inlined_call_operand.vmem [shape: bf16[512,8], index: 6, kind: input, shape index: {}]
  %s7 = inlined_call_operand.vmem [shape: f32[1,8], index: 7, kind: input, shape index: {}]
  %s8 = inlined_call_operand.hbm [shape: f32[8,8], index: 8, kind: output, shape index: {}]
  %s9 = sld [smem:[#allocation0]]
  $region46: #{tpu_custom_call.1} parent=0
    _
  %s11 = ssub.s32 1, %s9
  %s12 = scalar_select 0, %s11, %s9
  %13 = sst [smem:[#allocation2]] %s0
  $region1: #{tpu_custom_call.1} parent=0
    #allocation3 [shape = 'u8[524288]{0}', space=vmem, size = 0x80000, scoped, tag = 'input window, operand 4, single buffered']
    #allocation4 [shape = 's32[1]{0}', space=sflag, size = 0x4, scoped, tag = 'scoped memory for tpu_custom_call.1']
    #allocation5 [shape = 's32[1]{0}', space=sflag, size = 0x4, scoped, tag = 'scoped memory for tpu_custom_call.1']
    #allocation6 [shape = 'u8[4096]{0}', space=vmem, size = 0x1000, scoped, tag = 'output window, operand 0, single buffered']
    %14 = vsyncpa [#allocation4], 0
    %15 = vsyncpa [#allocation5], 0
    // Predicated region
    $region2: #{tpu_custom_call.1} parent=1 // pred_check
      _
    $region3: #{tpu_custom_call.1} parent=1 // pred_check_branch
      %17 = sbr.rel (0) target = $region5
    $region4: #{tpu_custom_call.1} parent=1 // pred_region
      _
    $region5: #{tpu_custom_call.1} parent=1 // pred_fallthru
      _
    // Predicated region
    $region6: #{tpu_custom_call.1} parent=1 // pred_check
      _
    $region7: #{tpu_custom_call.1} parent=1 // pred_check_branch
      %19 = sbr.rel (0) target = $region9
    $region8: #{tpu_custom_call.1} parent=1 // pred_region
      _
    $region9: #{tpu_custom_call.1} parent=1 // pred_fallthru
      _
    // Predicated region
    $region10: #{tpu_custom_call.1} parent=1 // pred_check
      _
    $region11: #{tpu_custom_call.1} parent=1 // pred_check_branch
      %21 = sbr.rel (0) target = $region13
    $region12: #{tpu_custom_call.1} parent=1 // pred_region
      _
    $region13: #{tpu_custom_call.1} parent=1 // pred_fallthru
      _
    // Predicated region
    $region14: #{tpu_custom_call.1} parent=1 // pred_check
      _
    $region15: #{tpu_custom_call.1} parent=1 // pred_check_branch
      %23 = sbr.rel (0) target = $region17
    $region16: #{tpu_custom_call.1} parent=1 // pred_region
      _
    $region17: #{tpu_custom_call.1} parent=1 // pred_fallthru
      _
    // Predicated region
    $region18: #{tpu_custom_call.1} parent=1 // pred_check
      _
    $region19: #{tpu_custom_call.1} parent=1 // pred_check_branch
      %25 = sbr.rel (0) target = $region21
    $region20: #{tpu_custom_call.1} parent=1 // pred_region
      %s27 = ssub.s32 16384, 16384
      %28 = vsyncadd [#allocation4], %s27
      %s29 = sshll.u32 [#allocation3], 4
      %s30 = int_to_ptr.vmem [resolvable:$true] %s29
      %35 = dma.hbm_to_vmem [thread:$0]  %s4, 16384, %s30, [#allocation4], 256, 256, 16
    $region21: #{tpu_custom_call.1} parent=1 // pred_fallthru
      _
    // Predicated region
    $region22: #{tpu_custom_call.1} parent=1 // pred_check
      _
    $region23: #{tpu_custom_call.1} parent=1 // pred_check_branch
      %37 = sbr.rel (0) target = $region25
    $region24: #{tpu_custom_call.1} parent=1 // pred_region
      _
    $region25: #{tpu_custom_call.1} parent=1 // pred_fallthru
      _
    // Predicated region
    $region26: #{tpu_custom_call.1} parent=1 // pred_check
      _
    $region27: #{tpu_custom_call.1} parent=1 // pred_check_branch
      %39 = sbr.rel (0) target = $region29
    $region28: #{tpu_custom_call.1} parent=1 // pred_region
      _
    $region29: #{tpu_custom_call.1} parent=1 // pred_fallthru
      _
    // Predicated region
    $region30: #{tpu_custom_call.1} parent=1 // pred_check
      _
    $region31: #{tpu_custom_call.1} parent=1 // pred_check_branch
      %41 = sbr.rel (0) target = $region33
    $region32: #{tpu_custom_call.1} parent=1 // pred_region
      _
    $region33: #{tpu_custom_call.1} parent=1 // pred_fallthru
      _
    // Predicated region
    $region34: #{tpu_custom_call.1} parent=1 // pred_check
      _
    $region35: #{tpu_custom_call.1} parent=1 // pred_check_branch
      %43 = sbr.rel (0) target = $region37
    $region36: #{tpu_custom_call.1} parent=1 // pred_region
      %44 = dma.done [#allocation4], 16384
    $region37: #{tpu_custom_call.1} parent=1 // pred_fallthru
      _
    %v46 = vld [vmem:[%s1] sm:$0xff]
    %v47 = vpack.c.bf16 %v46, %v46
    %v48 = vld [vmem:[%s2] sm:$0xff]
    %v49 = vld [vmem:[%s2 + $0x8] sm:$0xff]
    %v50 = vld [vmem:[%s2 + $0x10] sm:$0xff]
    %v51 = vld [vmem:[%s2 + $0x18] sm:$0xff]
    %v52 = vld [vmem:[%s3] sm:$0xf]
    %v54 = vlaneseq
    %v55 = vshrl.u32 %v54, 7
    %v56 = vsub.s32 0, %v55
    %v57 = vrot.slane %v52, %v56
    %v58 = vlaneseq
    %v59 = vshrl.u32 %v58, 7
    %v60 = vsub.s32 1, %v59
    %v61 = vrot.slane %v52, %v60
    %v62 = vlaneseq
    %v63 = vshrl.u32 %v62, 7
    %v64 = vsub.s32 2, %v63
    %v65 = vrot.slane %v52, %v64
    %v66 = vlaneseq
    %v67 = vshrl.u32 %v66, 7
    %v68 = vsub.s32 3, %v67
    %v69 = vrot.slane %v52, %v68
    %v78 = vunpack.c.l.b16 %v48
    %v79 = vunpack.c.h.b16 %v48
    %v80 = vunpack.c.l.b16 %v49
    %v81 = vunpack.c.h.b16 %v49
    %v82 = vunpack.c.l.b16 %v50
    %v83 = vunpack.c.h.b16 %v50
    %v84 = vunpack.c.l.b16 %v51
    %v85 = vunpack.c.h.b16 %v51
    %v86 = vpack.c.b16 %v82, %v78
    %v87 = vpack.c.b16 %v83, %v79
    %v88 = vpack.c.b16 %v84, %v80
    %v89 = vpack.c.b16 %v85, %v81
    %vm94 = vcmask 130048
    %v96 = vsel %vm94, %v47, 0
    %98 = vmatprep.subr.bf16.mxu0 0
    %99 = vmatpush1.bf16.msra.mxu0 0
    %100 = vmatprep.subr.bf16.mxu0 0
    %101 = vmatpush1.bf16.msra.mxu0 0
    %102 = vmatprep.subr.bf16.mxu0 0
    %103 = vmatpush1.bf16.msra.mxu0 0
    %104 = vmatprep.subr.bf16.mxu0 0
    %105 = vmatpush1.bf16.msra.mxu0 0
    %106 = vmatprep.subr.bf16.mxu0 0
    %107 = vmatpush1.bf16.msra.mxu0 0
    %108 = vmatprep.subr.bf16.mxu0 0
    %109 = vmatpush1.bf16.msra.mxu0 0
    %110 = vmatprep.subr.bf16.mxu0 0
    %111 = vmatpush1.bf16.msra.mxu0 0
    %112 = vmatprep.subr.bf16.mxu0 %v87
    %113 = vmatpush1.bf16.msra.mxu0 %v86
    %114 = vmatprep.subr.bf16.mxu0 0
    %115 = vmatpush2.bf16.msra.mxu0 0
    %116 = vmatprep.subr.bf16.mxu0 0
    %117 = vmatpush2.bf16.msra.mxu0 0
    %118 = vmatprep.subr.bf16.mxu0 0
    %119 = vmatpush2.bf16.msra.mxu0 0
    %120 = vmatprep.subr.bf16.mxu0 0
    %121 = vmatpush2.bf16.msra.mxu0 0
    %122 = vmatprep.subr.bf16.mxu0 0
    %123 = vmatpush2.bf16.msra.mxu0 0
    %124 = vmatprep.subr.bf16.mxu0 0
    %125 = vmatpush2.bf16.msra.mxu0 0
    %126 = vmatprep.subr.bf16.mxu0 0
    %127 = vmatpush2.bf16.msra.mxu0 0
    %128 = vmatprep.subr.bf16.mxu0 0
    %129 = vmatpush2.bf16.msra.mxu0 0
    %130 = vmatprep.mubr.bf16.mxu0 0
    %131 = vmatmul.mubr.bf16.gmra.mxu0 %v96
    %v132 = vpop.f32.mrf.mxu0
    %v133 = vadd.f32 %v57, %v132
    %v134 = vpop.f32.mrf.mxu0
    %v135 = vadd.f32 %v61, %v134
    %v136 = vpop.f32.mrf.mxu0
    %v137 = vpop.f32.mrf.mxu0
    %138 = vdwg.mxu0
    %139 = vmatprep.subr.bf16.mxu0 0
    %140 = vmatpush1.bf16.msra.mxu0 0
    %141 = vmatprep.subr.bf16.mxu0 0
    %142 = vmatpush1.bf16.msra.mxu0 0
    %143 = vmatprep.subr.bf16.mxu0 0
    %144 = vmatpush1.bf16.msra.mxu0 0
    %145 = vmatprep.subr.bf16.mxu0 0
    %146 = vmatpush1.bf16.msra.mxu0 0
    %147 = vmatprep.subr.bf16.mxu0 0
    %148 = vmatpush1.bf16.msra.mxu0 0
    %149 = vmatprep.subr.bf16.mxu0 0
    %150 = vmatpush1.bf16.msra.mxu0 0
    %151 = vmatprep.subr.bf16.mxu0 0
    %152 = vmatpush1.bf16.msra.mxu0 0
    %153 = vmatprep.subr.bf16.mxu0 %v89
    %154 = vmatpush1.bf16.msra.mxu0 %v88
    %155 = vmatprep.subr.bf16.mxu0 0
    %156 = vmatpush2.bf16.msra.mxu0 0
    %157 = vmatprep.subr.bf16.mxu0 0
    %158 = vmatpush2.bf16.msra.mxu0 0
    %159 = vmatprep.subr.bf16.mxu0 0
    %160 = vmatpush2.bf16.msra.mxu0 0
    %161 = vmatprep.subr.bf16.mxu0 0
    %162 = vmatpush2.bf16.msra.mxu0 0
    %163 = vmatprep.subr.bf16.mxu0 0
    %164 = vmatpush2.bf16.msra.mxu0 0
    %165 = vmatprep.subr.bf16.mxu0 0
    %166 = vmatpush2.bf16.msra.mxu0 0
    %167 = vmatprep.subr.bf16.mxu0 0
    %168 = vmatpush2.bf16.msra.mxu0 0
    %169 = vmatprep.subr.bf16.mxu0 0
    %170 = vmatpush2.bf16.msra.mxu0 0
    %171 = vmatprep.mubr.bf16.mxu0 0
    %172 = vmatmul.mubr.bf16.gmra.mxu0 %v96
    %v173 = vpop.f32.mrf.mxu0
    %v174 = vadd.f32 %v65, %v173
    %v175 = vpop.f32.mrf.mxu0
    %v176 = vadd.f32 %v69, %v175
    %v177 = vpop.f32.mrf.mxu0
    %v178 = vpop.f32.mrf.mxu0
    %179 = vdwg.mxu0
    %v180 = vmax.f32 %v133, 0.0
    %v181 = vmax.f32 %v135, 0.0
    %v182 = vmax.f32 %v174, 0.0
    %v183 = vmax.f32 %v176, 0.0
    %v184 = vpack.c.bf16 %v180, %v180
    %v185 = vpack.c.bf16 %v181, %v181
    %v186 = vpack.c.bf16 %v182, %v182
    %v187 = vpack.c.bf16 %v183, %v183
    %v188 = vld [vmem:[#allocation3] sm:$0xff]
    %v189 = vld [vmem:[#allocation3 + $0x8] sm:$0xff]
    %v190 = vld [vmem:[#allocation3 + $0x10] sm:$0xff]
    %v191 = vld [vmem:[#allocation3 + $0x18] sm:$0xff]
    %v192 = vld [vmem:[#allocation3 + $0x20] sm:$0xff]
    %v193 = vld [vmem:[#allocation3 + $0x28] sm:$0xff]
    %v194 = vld [vmem:[#allocation3 + $0x30] sm:$0xff]
    %v195 = vld [vmem:[#allocation3 + $0x38] sm:$0xff]
    %v196 = vld [vmem:[#allocation3 + $0x40] sm:$0xff]
    %v197 = vld [vmem:[#allocation3 + $0x48] sm:$0xff]
    %v198 = vld [vmem:[#allocation3 + $0x50] sm:$0xff]
    %v199 = vld [vmem:[#allocation3 + $0x58] sm:$0xff]
    %v200 = vld [vmem:[#allocation3 + $0x60] sm:$0xff]
    %v201 = vld [vmem:[#allocation3 + $0x68] sm:$0xff]
    %v202 = vld [vmem:[#allocation3 + $0x70] sm:$0xff]
    %v203 = vld [vmem:[#allocation3 + $0x78] sm:$0xff]
    %v204 = vld [vmem:[#allocation3 + $0x80] sm:$0xff]
    %v205 = vld [vmem:[#allocation3 + $0x88] sm:$0xff]
    %v206 = vld [vmem:[#allocation3 + $0x90] sm:$0xff]
    %v207 = vld [vmem:[#allocation3 + $0x98] sm:$0xff]
    %v208 = vld [vmem:[#allocation3 + $0xa0] sm:$0xff]
    %v209 = vld [vmem:[#allocation3 + $0xa8] sm:$0xff]
    %v210 = vld [vmem:[#allocation3 + $0xb0] sm:$0xff]
    %v211 = vld [vmem:[#allocation3 + $0xb8] sm:$0xff]
    %v212 = vld [vmem:[#allocation3 + $0xc0] sm:$0xff]
    %v213 = vld [vmem:[#allocation3 + $0xc8] sm:$0xff]
    %v214 = vld [vmem:[#allocation3 + $0xd0] sm:$0xff]
    %v215 = vld [vmem:[#allocation3 + $0xd8] sm:$0xff]
    %v216 = vld [vmem:[#allocation3 + $0xe0] sm:$0xff]
    %v217 = vld [vmem:[#allocation3 + $0xe8] sm:$0xff]
    %v218 = vld [vmem:[#allocation3 + $0xf0] sm:$0xff]
    %v219 = vld [vmem:[#allocation3 + $0xf8] sm:$0xff]
    %v220 = vld [vmem:[#allocation3 + $0x100] sm:$0xff]
    %v221 = vld [vmem:[#allocation3 + $0x108] sm:$0xff]
    %v222 = vld [vmem:[#allocation3 + $0x110] sm:$0xff]
    %v223 = vld [vmem:[#allocation3 + $0x118] sm:$0xff]
    %v224 = vld [vmem:[#allocation3 + $0x120] sm:$0xff]
    %v225 = vld [vmem:[#allocation3 + $0x128] sm:$0xff]
    %v226 = vld [vmem:[#allocation3 + $0x130] sm:$0xff]
    %v227 = vld [vmem:[#allocation3 + $0x138] sm:$0xff]
    %v228 = vld [vmem:[#allocation3 + $0x140] sm:$0xff]
    %v229 = vld [vmem:[#allocation3 + $0x148] sm:$0xff]
    %v230 = vld [vmem:[#allocation3 + $0x150] sm:$0xff]
    %v231 = vld [vmem:[#allocation3 + $0x158] sm:$0xff]
    %v232 = vld [vmem:[#allocation3 + $0x160] sm:$0xff]
    %v233 = vld [vmem:[#allocation3 + $0x168] sm:$0xff]
    %v234 = vld [vmem:[#allocation3 + $0x170] sm:$0xff]
    %v235 = vld [vmem:[#allocation3 + $0x178] sm:$0xff]
    %v236 = vld [vmem:[#allocation3 + $0x180] sm:$0xff]
    %v237 = vld [vmem:[#allocation3 + $0x188] sm:$0xff]
    %v238 = vld [vmem:[#allocation3 + $0x190] sm:$0xff]
    %v239 = vld [vmem:[#allocation3 + $0x198] sm:$0xff]
    %v240 = vld [vmem:[#allocation3 + $0x1a0] sm:$0xff]
    %v241 = vld [vmem:[#allocation3 + $0x1a8] sm:$0xff]
    %v242 = vld [vmem:[#allocation3 + $0x1b0] sm:$0xff]
    %v243 = vld [vmem:[#allocation3 + $0x1b8] sm:$0xff]
    %v244 = vld [vmem:[#allocation3 + $0x1c0] sm:$0xff]
    %v245 = vld [vmem:[#allocation3 + $0x1c8] sm:$0xff]
    %v246 = vld [vmem:[#allocation3 + $0x1d0] sm:$0xff]
    %v247 = vld [vmem:[#allocation3 + $0x1d8] sm:$0xff]
    %v248 = vld [vmem:[#allocation3 + $0x1e0] sm:$0xff]
    %v249 = vld [vmem:[#allocation3 + $0x1e8] sm:$0xff]
    %v250 = vld [vmem:[#allocation3 + $0x1f0] sm:$0xff]
    %v251 = vld [vmem:[#allocation3 + $0x1f8] sm:$0xff]
    %v252 = vld [vmem:[#allocation3 + $0x200] sm:$0xff]
    %v253 = vld [vmem:[#allocation3 + $0x208] sm:$0xff]
    %v254 = vld [vmem:[#allocation3 + $0x210] sm:$0xff]
    %v255 = vld [vmem:[#allocation3 + $0x218] sm:$0xff]
    %v256 = vld [vmem:[#allocation3 + $0x220] sm:$0xff]
    %v257 = vld [vmem:[#allocation3 + $0x228] sm:$0xff]
    %v258 = vld [vmem:[#allocation3 + $0x230] sm:$0xff]
    %v259 = vld [vmem:[#allocation3 + $0x238] sm:$0xff]
    %v260 = vld [vmem:[#allocation3 + $0x240] sm:$0xff]
    %v261 = vld [vmem:[#allocation3 + $0x248] sm:$0xff]
    %v262 = vld [vmem:[#allocation3 + $0x250] sm:$0xff]
    %v263 = vld [vmem:[#allocation3 + $0x258] sm:$0xff]
    %v264 = vld [vmem:[#allocation3 + $0x260] sm:$0xff]
    %v265 = vld [vmem:[#allocation3 + $0x268] sm:$0xff]
    %v266 = vld [vmem:[#allocation3 + $0x270] sm:$0xff]
    %v267 = vld [vmem:[#allocation3 + $0x278] sm:$0xff]
    %v268 = vld [vmem:[#allocation3 + $0x280] sm:$0xff]
    %v269 = vld [vmem:[#allocation3 + $0x288] sm:$0xff]
    %v270 = vld [vmem:[#allocation3 + $0x290] sm:$0xff]
    %v271 = vld [vmem:[#allocation3 + $0x298] sm:$0xff]
    %v272 = vld [vmem:[#allocation3 + $0x2a0] sm:$0xff]
    %v273 = vld [vmem:[#allocation3 + $0x2a8] sm:$0xff]
    %v274 = vld [vmem:[#allocation3 + $0x2b0] sm:$0xff]
    %v275 = vld [vmem:[#allocation3 + $0x2b8] sm:$0xff]
    %v276 = vld [vmem:[#allocation3 + $0x2c0] sm:$0xff]
    %v277 = vld [vmem:[#allocation3 + $0x2c8] sm:$0xff]
    %v278 = vld [vmem:[#allocation3 + $0x2d0] sm:$0xff]
    %v279 = vld [vmem:[#allocation3 + $0x2d8] sm:$0xff]
    %v280 = vld [vmem:[#allocation3 + $0x2e0] sm:$0xff]
    %v281 = vld [vmem:[#allocation3 + $0x2e8] sm:$0xff]
    %v282 = vld [vmem:[#allocation3 + $0x2f0] sm:$0xff]
    %v283 = vld [vmem:[#allocation3 + $0x2f8] sm:$0xff]
    %v284 = vld [vmem:[#allocation3 + $0x300] sm:$0xff]
    %v285 = vld [vmem:[#allocation3 + $0x308] sm:$0xff]
    %v286 = vld [vmem:[#allocation3 + $0x310] sm:$0xff]
    %v287 = vld [vmem:[#allocation3 + $0x318] sm:$0xff]
    %v288 = vld [vmem:[#allocation3 + $0x320] sm:$0xff]
    %v289 = vld [vmem:[#allocation3 + $0x328] sm:$0xff]
    %v290 = vld [vmem:[#allocation3 + $0x330] sm:$0xff]
    %v291 = vld [vmem:[#allocation3 + $0x338] sm:$0xff]
    %v292 = vld [vmem:[#allocation3 + $0x340] sm:$0xff]
    %v293 = vld [vmem:[#allocation3 + $0x348] sm:$0xff]
    %v294 = vld [vmem:[#allocation3 + $0x350] sm:$0xff]
    %v295 = vld [vmem:[#allocation3 + $0x358] sm:$0xff]
    %v296 = vld [vmem:[#allocation3 + $0x360] sm:$0xff]
    %v297 = vld [vmem:[#allocation3 + $0x368] sm:$0xff]
    %v298 = vld [vmem:[#allocation3 + $0x370] sm:$0xff]
    %v299 = vld [vmem:[#allocation3 + $0x378] sm:$0xff]
    %v300 = vld [vmem:[#allocation3 + $0x380] sm:$0xff]
    %v301 = vld [vmem:[#allocation3 + $0x388] sm:$0xff]
    %v302 = vld [vmem:[#allocation3 + $0x390] sm:$0xff]
    %v303 = vld [vmem:[#allocation3 + $0x398] sm:$0xff]
    %v304 = vld [vmem:[#allocation3 + $0x3a0] sm:$0xff]
    %v305 = vld [vmem:[#allocation3 + $0x3a8] sm:$0xff]
    %v306 = vld [vmem:[#allocation3 + $0x3b0] sm:$0xff]
    %v307 = vld [vmem:[#allocation3 + $0x3b8] sm:$0xff]
    %v308 = vld [vmem:[#allocation3 + $0x3c0] sm:$0xff]
    %v309 = vld [vmem:[#allocation3 + $0x3c8] sm:$0xff]
    %v310 = vld [vmem:[#allocation3 + $0x3d0] sm:$0xff]
    %v311 = vld [vmem:[#allocation3 + $0x3d8] sm:$0xff]
    %v312 = vld [vmem:[#allocation3 + $0x3e0] sm:$0xff]
    %v313 = vld [vmem:[#allocation3 + $0x3e8] sm:$0xff]
    %v314 = vld [vmem:[#allocation3 + $0x3f0] sm:$0xff]
    %v315 = vld [vmem:[#allocation3 + $0x3f8] sm:$0xff]
    %v316 = vld [vmem:[%s5] sm:$0xf]
    %v318 = vlaneseq
    %v319 = vshrl.u32 %v318, 7
    %v320 = vsub.s32 0, %v319
    %v321 = vrot.slane %v316, %v320
    %v322 = vlaneseq
    %v323 = vshrl.u32 %v322, 7
    %v324 = vsub.s32 1, %v323
    %v325 = vrot.slane %v316, %v324
    %v326 = vlaneseq
    %v327 = vshrl.u32 %v326, 7
    %v328 = vsub.s32 2, %v327
    %v329 = vrot.slane %v316, %v328
    %v330 = vlaneseq
    %v331 = vshrl.u32 %v330, 7
    %v332 = vsub.s32 3, %v331
    %v333 = vrot.slane %v316, %v332
    %v466 = vunpack.c.l.b16 %v188
    %v467 = vunpack.c.h.b16 %v188
    %v468 = vunpack.c.l.b16 %v189
    %v469 = vunpack.c.h.b16 %v189
    %v470 = vunpack.c.l.b16 %v190
    %v471 = vunpack.c.h.b16 %v190
    %v472 = vunpack.c.l.b16 %v191
    %v473 = vunpack.c.h.b16 %v191
    %v474 = vunpack.c.l.b16 %v192
    %v475 = vunpack.c.h.b16 %v192
    %v476 = vunpack.c.l.b16 %v193
    %v477 = vunpack.c.h.b16 %v193
    %v478 = vunpack.c.l.b16 %v194
    %v479 = vunpack.c.h.b16 %v194
    %v480 = vunpack.c.l.b16 %v195
    %v481 = vunpack.c.h.b16 %v195
    %v482 = vunpack.c.l.b16 %v196
    %v483 = vunpack.c.h.b16 %v196
    %v484 = vunpack.c.l.b16 %v197
    %v485 = vunpack.c.h.b16 %v197
    %v486 = vunpack.c.l.b16 %v198
    %v487 = vunpack.c.h.b16 %v198
    %v488 = vunpack.c.l.b16 %v199
    %v489 = vunpack.c.h.b16 %v199
    %v490 = vunpack.c.l.b16 %v200
    %v491 = vunpack.c.h.b16 %v200
    %v492 = vunpack.c.l.b16 %v201
    %v493 = vunpack.c.h.b16 %v201
    %v494 = vunpack.c.l.b16 %v202
    %v495 = vunpack.c.h.b16 %v202
    %v496 = vunpack.c.l.b16 %v203
    %v497 = vunpack.c.h.b16 %v203
    %v498 = vunpack.c.l.b16 %v204
    %v499 = vunpack.c.h.b16 %v204
    %v500 = vunpack.c.l.b16 %v205
    %v501 = vunpack.c.h.b16 %v205
    %v502 = vunpack.c.l.b16 %v206
    %v503 = vunpack.c.h.b16 %v206
    %v504 = vunpack.c.l.b16 %v207
    %v505 = vunpack.c.h.b16 %v207
    %v506 = vunpack.c.l.b16 %v208
    %v507 = vunpack.c.h.b16 %v208
    %v508 = vunpack.c.l.b16 %v209
    %v509 = vunpack.c.h.b16 %v209
    %v510 = vunpack.c.l.b16 %v210
    %v511 = vunpack.c.h.b16 %v210
    %v512 = vunpack.c.l.b16 %v211
    %v513 = vunpack.c.h.b16 %v211
    %v514 = vunpack.c.l.b16 %v212
    %v515 = vunpack.c.h.b16 %v212
    %v516 = vunpack.c.l.b16 %v213
    %v517 = vunpack.c.h.b16 %v213
    %v518 = vunpack.c.l.b16 %v214
    %v519 = vunpack.c.h.b16 %v214
    %v520 = vunpack.c.l.b16 %v215
    %v521 = vunpack.c.h.b16 %v215
    %v522 = vunpack.c.l.b16 %v216
    %v523 = vunpack.c.h.b16 %v216
    %v524 = vunpack.c.l.b16 %v217
    %v525 = vunpack.c.h.b16 %v217
    %v526 = vunpack.c.l.b16 %v218
    %v527 = vunpack.c.h.b16 %v218
    %v528 = vunpack.c.l.b16 %v219
    %v529 = vunpack.c.h.b16 %v219
    %v530 = vunpack.c.l.b16 %v220
    %v531 = vunpack.c.h.b16 %v220
    %v532 = vunpack.c.l.b16 %v221
    %v533 = vunpack.c.h.b16 %v221
    %v534 = vunpack.c.l.b16 %v222
    %v535 = vunpack.c.h.b16 %v222
    %v536 = vunpack.c.l.b16 %v223
    %v537 = vunpack.c.h.b16 %v223
    %v538 = vunpack.c.l.b16 %v224
    %v539 = vunpack.c.h.b16 %v224
    %v540 = vunpack.c.l.b16 %v225
    %v541 = vunpack.c.h.b16 %v225
    %v542 = vunpack.c.l.b16 %v226
    %v543 = vunpack.c.h.b16 %v226
    %v544 = vunpack.c.l.b16 %v227
    %v545 = vunpack.c.h.b16 %v227
    %v546 = vunpack.c.l.b16 %v228
    %v547 = vunpack.c.h.b16 %v228
    %v548 = vunpack.c.l.b16 %v229
    %v549 = vunpack.c.h.b16 %v229
    %v550 = vunpack.c.l.b16 %v230
    %v551 = vunpack.c.h.b16 %v230
    %v552 = vunpack.c.l.b16 %v231
    %v553 = vunpack.c.h.b16 %v231
    %v554 = vunpack.c.l.b16 %v232
    %v555 = vunpack.c.h.b16 %v232
    %v556 = vunpack.c.l.b16 %v233
    %v557 = vunpack.c.h.b16 %v233
    %v558 = vunpack.c.l.b16 %v234
    %v559 = vunpack.c.h.b16 %v234
    %v560 = vunpack.c.l.b16 %v235
    %v561 = vunpack.c.h.b16 %v235
    %v562 = vunpack.c.l.b16 %v236
    %v563 = vunpack.c.h.b16 %v236
    %v564 = vunpack.c.l.b16 %v237
    %v565 = vunpack.c.h.b16 %v237
    %v566 = vunpack.c.l.b16 %v238
    %v567 = vunpack.c.h.b16 %v238
    %v568 = vunpack.c.l.b16 %v239
    %v569 = vunpack.c.h.b16 %v239
    %v570 = vunpack.c.l.b16 %v240
    %v571 = vunpack.c.h.b16 %v240
    %v572 = vunpack.c.l.b16 %v241
    %v573 = vunpack.c.h.b16 %v241
    %v574 = vunpack.c.l.b16 %v242
    %v575 = vunpack.c.h.b16 %v242
    %v576 = vunpack.c.l.b16 %v243
    %v577 = vunpack.c.h.b16 %v243
    %v578 = vunpack.c.l.b16 %v244
    %v579 = vunpack.c.h.b16 %v244
    %v580 = vunpack.c.l.b16 %v245
    %v581 = vunpack.c.h.b16 %v245
    %v582 = vunpack.c.l.b16 %v246
    %v583 = vunpack.c.h.b16 %v246
    %v584 = vunpack.c.l.b16 %v247
    %v585 = vunpack.c.h.b16 %v247
    %v586 = vunpack.c.l.b16 %v248
    %v587 = vunpack.c.h.b16 %v248
    %v588 = vunpack.c.l.b16 %v249
    %v589 = vunpack.c.h.b16 %v249
    %v590 = vunpack.c.l.b16 %v250
    %v591 = vunpack.c.h.b16 %v250
    %v592 = vunpack.c.l.b16 %v251
    %v593 = vunpack.c.h.b16 %v251
    %v594 = vunpack.c.l.b16 %v252
    %v595 = vunpack.c.h.b16 %v252
    %v596 = vunpack.c.l.b16 %v253
    %v597 = vunpack.c.h.b16 %v253
    %v598 = vunpack.c.l.b16 %v254
    %v599 = vunpack.c.h.b16 %v254
    %v600 = vunpack.c.l.b16 %v255
    %v601 = vunpack.c.h.b16 %v255
    %v602 = vunpack.c.l.b16 %v256
    %v603 = vunpack.c.h.b16 %v256
    %v604 = vunpack.c.l.b16 %v257
    %v605 = vunpack.c.h.b16 %v257
    %v606 = vunpack.c.l.b16 %v258
    %v607 = vunpack.c.h.b16 %v258
    %v608 = vunpack.c.l.b16 %v259
    %v609 = vunpack.c.h.b16 %v259
    %v610 = vunpack.c.l.b16 %v260
    %v611 = vunpack.c.h.b16 %v260
    %v612 = vunpack.c.l.b16 %v261
    %v613 = vunpack.c.h.b16 %v261
    %v614 = vunpack.c.l.b16 %v262
    %v615 = vunpack.c.h.b16 %v262
    %v616 = vunpack.c.l.b16 %v263
    %v617 = vunpack.c.h.b16 %v263
    %v618 = vunpack.c.l.b16 %v264
    %v619 = vunpack.c.h.b16 %v264
    %v620 = vunpack.c.l.b16 %v265
    %v621 = vunpack.c.h.b16 %v265
    %v622 = vunpack.c.l.b16 %v266
    %v623 = vunpack.c.h.b16 %v266
    %v624 = vunpack.c.l.b16 %v267
    %v625 = vunpack.c.h.b16 %v267
    %v626 = vunpack.c.l.b16 %v268
    %v627 = vunpack.c.h.b16 %v268
    %v628 = vunpack.c.l.b16 %v269
    %v629 = vunpack.c.h.b16 %v269
    %v630 = vunpack.c.l.b16 %v270
    %v631 = vunpack.c.h.b16 %v270
    %v632 = vunpack.c.l.b16 %v271
    %v633 = vunpack.c.h.b16 %v271
    %v634 = vunpack.c.l.b16 %v272
    %v635 = vunpack.c.h.b16 %v272
    %v636 = vunpack.c.l.b16 %v273
    %v637 = vunpack.c.h.b16 %v273
    %v638 = vunpack.c.l.b16 %v274
    %v639 = vunpack.c.h.b16 %v274
    %v640 = vunpack.c.l.b16 %v275
    %v641 = vunpack.c.h.b16 %v275
    %v642 = vunpack.c.l.b16 %v276
    %v643 = vunpack.c.h.b16 %v276
    %v644 = vunpack.c.l.b16 %v277
    %v645 = vunpack.c.h.b16 %v277
    %v646 = vunpack.c.l.b16 %v278
    %v647 = vunpack.c.h.b16 %v278
    %v648 = vunpack.c.l.b16 %v279
    %v649 = vunpack.c.h.b16 %v279
    %v650 = vunpack.c.l.b16 %v280
    %v651 = vunpack.c.h.b16 %v280
    %v652 = vunpack.c.l.b16 %v281
    %v653 = vunpack.c.h.b16 %v281
    %v654 = vunpack.c.l.b16 %v282
    %v655 = vunpack.c.h.b16 %v282
    %v656 = vunpack.c.l.b16 %v283
    %v657 = vunpack.c.h.b16 %v283
    %v658 = vunpack.c.l.b16 %v284
    %v659 = vunpack.c.h.b16 %v284
    %v660 = vunpack.c.l.b16 %v285
    %v661 = vunpack.c.h.b16 %v285
    %v662 = vunpack.c.l.b16 %v286
    %v663 = vunpack.c.h.b16 %v286
    %v664 = vunpack.c.l.b16 %v287
    %v665 = vunpack.c.h.b16 %v287
    %v666 = vunpack.c.l.b16 %v288
    %v667 = vunpack.c.h.b16 %v288
    %v668 = vunpack.c.l.b16 %v289
    %v669 = vunpack.c.h.b16 %v289
    %v670 = vunpack.c.l.b16 %v290
    %v671 = vunpack.c.h.b16 %v290
    %v672 = vunpack.c.l.b16 %v291
    %v673 = vunpack.c.h.b16 %v291
    %v674 = vunpack.c.l.b16 %v292
    %v675 = vunpack.c.h.b16 %v292
    %v676 = vunpack.c.l.b16 %v293
    %v677 = vunpack.c.h.b16 %v293
    %v678 = vunpack.c.l.b16 %v294
    %v679 = vunpack.c.h.b16 %v294
    %v680 = vunpack.c.l.b16 %v295
    %v681 = vunpack.c.h.b16 %v295
    %v682 = vunpack.c.l.b16 %v296
    %v683 = vunpack.c.h.b16 %v296
    %v684 = vunpack.c.l.b16 %v297
    %v685 = vunpack.c.h.b16 %v297
    %v686 = vunpack.c.l.b16 %v298
    %v687 = vunpack.c.h.b16 %v298
    %v688 = vunpack.c.l.b16 %v299
    %v689 = vunpack.c.h.b16 %v299
    %v690 = vunpack.c.l.b16 %v300
    %v691 = vunpack.c.h.b16 %v300
    %v692 = vunpack.c.l.b16 %v301
    %v693 = vunpack.c.h.b16 %v301
    %v694 = vunpack.c.l.b16 %v302
    %v695 = vunpack.c.h.b16 %v302
    %v696 = vunpack.c.l.b16 %v303
    %v697 = vunpack.c.h.b16 %v303
    %v698 = vunpack.c.l.b16 %v304
    %v699 = vunpack.c.h.b16 %v304
    %v700 = vunpack.c.l.b16 %v305
    %v701 = vunpack.c.h.b16 %v305
    %v702 = vunpack.c.l.b16 %v306
    %v703 = vunpack.c.h.b16 %v306
    %v704 = vunpack.c.l.b16 %v307
    %v705 = vunpack.c.h.b16 %v307
    %v706 = vunpack.c.l.b16 %v308
    %v707 = vunpack.c.h.b16 %v308
    %v708 = vunpack.c.l.b16 %v309
    %v709 = vunpack.c.h.b16 %v309
    %v710 = vunpack.c.l.b16 %v310
    %v711 = vunpack.c.h.b16 %v310
    %v712 = vunpack.c.l.b16 %v311
    %v713 = vunpack.c.h.b16 %v311
    %v714 = vunpack.c.l.b16 %v312
    %v715 = vunpack.c.h.b16 %v312
    %v716 = vunpack.c.l.b16 %v313
    %v717 = vunpack.c.h.b16 %v313
    %v718 = vunpack.c.l.b16 %v314
    %v719 = vunpack.c.h.b16 %v314
    %v720 = vunpack.c.l.b16 %v315
    %v721 = vunpack.c.h.b16 %v315
    %v722 = vpack.c.b16 %v470, %v466
    %v723 = vpack.c.b16 %v471, %v467
    %v724 = vpack.c.b16 %v472, %v468
    %v725 = vpack.c.b16 %v473, %v469
    %v726 = vpack.c.b16 %v478, %v474
    %v727 = vpack.c.b16 %v479, %v475
    %v728 = vpack.c.b16 %v480, %v476
    %v729 = vpack.c.b16 %v481, %v477
    %v730 = vpack.c.b16 %v486, %v482
    %v731 = vpack.c.b16 %v487, %v483
    %v732 = vpack.c.b16 %v488, %v484
    %v733 = vpack.c.b16 %v489, %v485
    %v734 = vpack.c.b16 %v494, %v490
    %v735 = vpack.c.b16 %v495, %v491
    %v736 = vpack.c.b16 %v496, %v492
    %v737 = vpack.c.b16 %v497, %v493
    %v738 = vpack.c.b16 %v502, %v498
    %v739 = vpack.c.b16 %v503, %v499
    %v740 = vpack.c.b16 %v504, %v500
    %v741 = vpack.c.b16 %v505, %v501
    %v742 = vpack.c.b16 %v510, %v506
    %v743 = vpack.c.b16 %v511, %v507
    %v744 = vpack.c.b16 %v512, %v508
    %v745 = vpack.c.b16 %v513, %v509
    %v746 = vpack.c.b16 %v518, %v514
    %v747 = vpack.c.b16 %v519, %v515
    %v748 = vpack.c.b16 %v520, %v516
    %v749 = vpack.c.b16 %v521, %v517
    %v750 = vpack.c.b16 %v526, %v522
    %v751 = vpack.c.b16 %v527, %v523
    %v752 = vpack.c.b16 %v528, %v524
    %v753 = vpack.c.b16 %v529, %v525
    %v754 = vpack.c.b16 %v534, %v530
    %v755 = vpack.c.b16 %v535, %v531
    %v756 = vpack.c.b16 %v536, %v532
    %v757 = vpack.c.b16 %v537, %v533
    %v758 = vpack.c.b16 %v542, %v538
    %v759 = vpack.c.b16 %v543, %v539
    %v760 = vpack.c.b16 %v544, %v540
    %v761 = vpack.c.b16 %v545, %v541
    %v762 = vpack.c.b16 %v550, %v546
    %v763 = vpack.c.b16 %v551, %v547
    %v764 = vpack.c.b16 %v552, %v548
    %v765 = vpack.c.b16 %v553, %v549
    %v766 = vpack.c.b16 %v558, %v554
    %v767 = vpack.c.b16 %v559, %v555
    %v768 = vpack.c.b16 %v560, %v556
    %v769 = vpack.c.b16 %v561, %v557
    %v770 = vpack.c.b16 %v566, %v562
    %v771 = vpack.c.b16 %v567, %v563
    %v772 = vpack.c.b16 %v568, %v564
    %v773 = vpack.c.b16 %v569, %v565
    %v774 = vpack.c.b16 %v574, %v570
    %v775 = vpack.c.b16 %v575, %v571
    %v776 = vpack.c.b16 %v576, %v572
    %v777 = vpack.c.b16 %v577, %v573
    %v778 = vpack.c.b16 %v582, %v578
    %v779 = vpack.c.b16 %v583, %v579
    %v780 = vpack.c.b16 %v584, %v580
    %v781 = vpack.c.b16 %v585, %v581
    %v782 = vpack.c.b16 %v590, %v586
    %v783 = vpack.c.b16 %v591, %v587
    %v784 = vpack.c.b16 %v592, %v588
    %v785 = vpack.c.b16 %v593, %v589
    %v786 = vpack.c.b16 %v598, %v594
    %v787 = vpack.c.b16 %v599, %v595
    %v788 = vpack.c.b16 %v600, %v596
    %v789 = vpack.c.b16 %v601, %v597
    %v790 = vpack.c.b16 %v606, %v602
    %v791 = vpack.c.b16 %v607, %v603
    %v792 = vpack.c.b16 %v608, %v604
    %v793 = vpack.c.b16 %v609, %v605
    %v794 = vpack.c.b16 %v614, %v610
    %v795 = vpack.c.b16 %v615, %v611
    %v796 = vpack.c.b16 %v616, %v612
    %v797 = vpack.c.b16 %v617, %v613
    %v798 = vpack.c.b16 %v622, %v618
    %v799 = vpack.c.b16 %v623, %v619
    %v800 = vpack.c.b16 %v624, %v620
    %v801 = vpack.c.b16 %v625, %v621
    %v802 = vpack.c.b16 %v630, %v626
    %v803 = vpack.c.b16 %v631, %v627
    %v804 = vpack.c.b16 %v632, %v628
    %v805 = vpack.c.b16 %v633, %v629
    %v806 = vpack.c.b16 %v638, %v634
    %v807 = vpack.c.b16 %v639, %v635
    %v808 = vpack.c.b16 %v640, %v636
    %v809 = vpack.c.b16 %v641, %v637
    %v810 = vpack.c.b16 %v646, %v642
    %v811 = vpack.c.b16 %v647, %v643
    %v812 = vpack.c.b16 %v648, %v644
    %v813 = vpack.c.b16 %v649, %v645
    %v814 = vpack.c.b16 %v654, %v650
    %v815 = vpack.c.b16 %v655, %v651
    %v816 = vpack.c.b16 %v656, %v652
    %v817 = vpack.c.b16 %v657, %v653
    %v818 = vpack.c.b16 %v662, %v658
    %v819 = vpack.c.b16 %v663, %v659
    %v820 = vpack.c.b16 %v664, %v660
    %v821 = vpack.c.b16 %v665, %v661
    %v822 = vpack.c.b16 %v670, %v666
    %v823 = vpack.c.b16 %v671, %v667
    %v824 = vpack.c.b16 %v672, %v668
    %v825 = vpack.c.b16 %v673, %v669
    %v826 = vpack.c.b16 %v678, %v674
    %v827 = vpack.c.b16 %v679, %v675
    %v828 = vpack.c.b16 %v680, %v676
    %v829 = vpack.c.b16 %v681, %v677
    %v830 = vpack.c.b16 %v686, %v682
    %v831 = vpack.c.b16 %v687, %v683
    %v832 = vpack.c.b16 %v688, %v684
    %v833 = vpack.c.b16 %v689, %v685
    %v834 = vpack.c.b16 %v694, %v690
    %v835 = vpack.c.b16 %v695, %v691
    %v836 = vpack.c.b16 %v696, %v692
    %v837 = vpack.c.b16 %v697, %v693
    %v838 = vpack.c.b16 %v702, %v698
    %v839 = vpack.c.b16 %v703, %v699
    %v840 = vpack.c.b16 %v704, %v700
    %v841 = vpack.c.b16 %v705, %v701
    %v842 = vpack.c.b16 %v710, %v706
    %v843 = vpack.c.b16 %v711, %v707
    %v844 = vpack.c.b16 %v712, %v708
    %v845 = vpack.c.b16 %v713, %v709
    %v846 = vpack.c.b16 %v718, %v714
    %v847 = vpack.c.b16 %v719, %v715
    %v848 = vpack.c.b16 %v720, %v716
    %v849 = vpack.c.b16 %v721, %v717
    %978 = vmatprep.subr.bf16.mxu0 %v751
    %979 = vmatpush1.bf16.msra.mxu0 %v750
    %980 = vmatprep.subr.bf16.mxu0 %v747
    %981 = vmatpush1.bf16.msra.mxu0 %v746
    %982 = vmatprep.subr.bf16.mxu0 %v743
    %983 = vmatpush1.bf16.msra.mxu0 %v742
    %984 = vmatprep.subr.bf16.mxu0 %v739
    %985 = vmatpush1.bf16.msra.mxu0 %v738
    %986 = vmatprep.subr.bf16.mxu0 %v735
    %987 = vmatpush1.bf16.msra.mxu0 %v734
    %988 = vmatprep.subr.bf16.mxu0 %v731
    %989 = vmatpush1.bf16.msra.mxu0 %v730
    %990 = vmatprep.subr.bf16.mxu0 %v727
    %991 = vmatpush1.bf16.msra.mxu0 %v726
    %992 = vmatprep.subr.bf16.mxu0 %v723
    %993 = vmatpush1.bf16.msra.mxu0 %v722
    %994 = vmatprep.subr.bf16.mxu0 %v783
    %995 = vmatpush2.bf16.msra.mxu0 %v782
    %996 = vmatprep.subr.bf16.mxu0 %v779
    %997 = vmatpush2.bf16.msra.mxu0 %v778
    %998 = vmatprep.subr.bf16.mxu0 %v775
    %999 = vmatpush2.bf16.msra.mxu0 %v774
    %1000 = vmatprep.subr.bf16.mxu0 %v771
    %1001 = vmatpush2.bf16.msra.mxu0 %v770
    %1002 = vmatprep.subr.bf16.mxu0 %v767
    %1003 = vmatpush2.bf16.msra.mxu0 %v766
    %1004 = vmatprep.subr.bf16.mxu0 %v763
    %1005 = vmatpush2.bf16.msra.mxu0 %v762
    %1006 = vmatprep.subr.bf16.mxu0 %v759
    %1007 = vmatpush2.bf16.msra.mxu0 %v758
    %1008 = vmatprep.subr.bf16.mxu0 %v755
    %1009 = vmatpush2.bf16.msra.mxu0 %v754
    %1010 = vmatprep.mubr.bf16.mxu0 %v185
    %1011 = vmatmul.mubr.bf16.gmra.mxu0 %v184
    %v1012 = vpop.f32.mrf.mxu0
    %v1013 = vadd.f32 %v321, %v1012
    %v1014 = vpop.f32.mrf.mxu0
    %v1015 = vadd.f32 %v325, %v1014
    %v1016 = vpop.f32.mrf.mxu0
    %v1017 = vpop.f32.mrf.mxu0
    %1018 = vdwg.mxu0
    %1019 = vmatprep.subr.bf16.mxu0 %v815
    %1020 = vmatpush1.bf16.msra.mxu0 %v814
    %1021 = vmatprep.subr.bf16.mxu0 %v811
    %1022 = vmatpush1.bf16.msra.mxu0 %v810
    %1023 = vmatprep.subr.bf16.mxu0 %v807
    %1024 = vmatpush1.bf16.msra.mxu0 %v806
    %1025 = vmatprep.subr.bf16.mxu0 %v803
    %1026 = vmatpush1.bf16.msra.mxu0 %v802
    %1027 = vmatprep.subr.bf16.mxu0 %v799
    %1028 = vmatpush1.bf16.msra.mxu0 %v798
    %1029 = vmatprep.subr.bf16.mxu0 %v795
    %1030 = vmatpush1.bf16.msra.mxu0 %v794
    %1031 = vmatprep.subr.bf16.mxu0 %v791
    %1032 = vmatpush1.bf16.msra.mxu0 %v790
    %1033 = vmatprep.subr.bf16.mxu0 %v787
    %1034 = vmatpush1.bf16.msra.mxu0 %v786
    %1035 = vmatprep.subr.bf16.mxu0 %v847
    %1036 = vmatpush2.bf16.msra.mxu0 %v846
    %1037 = vmatprep.subr.bf16.mxu0 %v843
    %1038 = vmatpush2.bf16.msra.mxu0 %v842
    %1039 = vmatprep.subr.bf16.mxu0 %v839
    %1040 = vmatpush2.bf16.msra.mxu0 %v838
    %1041 = vmatprep.subr.bf16.mxu0 %v835
    %1042 = vmatpush2.bf16.msra.mxu0 %v834
    %1043 = vmatprep.subr.bf16.mxu0 %v831
    %1044 = vmatpush2.bf16.msra.mxu0 %v830
    %1045 = vmatprep.subr.bf16.mxu0 %v827
    %1046 = vmatpush2.bf16.msra.mxu0 %v826
    %1047 = vmatprep.subr.bf16.mxu0 %v823
    %1048 = vmatpush2.bf16.msra.mxu0 %v822
    %1049 = vmatprep.subr.bf16.mxu0 %v819
    %1050 = vmatpush2.bf16.msra.mxu0 %v818
    %1051 = vmatprep.mubr.bf16.mxu0 %v187
    %1052 = vmatmul.mubr.bf16.gmra.mxu0 %v186
    %v1053 = vpop.f32.mrf.mxu0
    %v1054 = vadd.f32 %v1013, %v1053
    %v1055 = vpop.f32.mrf.mxu0
    %v1056 = vadd.f32 %v1015, %v1055
    %v1057 = vpop.f32.mrf.mxu0
    %v1058 = vpop.f32.mrf.mxu0
    %1059 = vdwg.mxu0
    %1060 = vmatprep.subr.bf16.mxu0 %v753
    %1061 = vmatpush1.bf16.msra.mxu0 %v752
    %1062 = vmatprep.subr.bf16.mxu0 %v749
    %1063 = vmatpush1.bf16.msra.mxu0 %v748
    %1064 = vmatprep.subr.bf16.mxu0 %v745
    %1065 = vmatpush1.bf16.msra.mxu0 %v744
    %1066 = vmatprep.subr.bf16.mxu0 %v741
    %1067 = vmatpush1.bf16.msra.mxu0 %v740
    %1068 = vmatprep.subr.bf16.mxu0 %v737
    %1069 = vmatpush1.bf16.msra.mxu0 %v736
    %1070 = vmatprep.subr.bf16.mxu0 %v733
    %1071 = vmatpush1.bf16.msra.mxu0 %v732
    %1072 = vmatprep.subr.bf16.mxu0 %v729
    %1073 = vmatpush1.bf16.msra.mxu0 %v728
    %1074 = vmatprep.subr.bf16.mxu0 %v725
    %1075 = vmatpush1.bf16.msra.mxu0 %v724
    %1076 = vmatprep.subr.bf16.mxu0 %v785
    %1077 = vmatpush2.bf16.msra.mxu0 %v784
    %1078 = vmatprep.subr.bf16.mxu0 %v781
    %1079 = vmatpush2.bf16.msra.mxu0 %v780
    %1080 = vmatprep.subr.bf16.mxu0 %v777
    %1081 = vmatpush2.bf16.msra.mxu0 %v776
    %1082 = vmatprep.subr.bf16.mxu0 %v773
    %1083 = vmatpush2.bf16.msra.mxu0 %v772
    %1084 = vmatprep.subr.bf16.mxu0 %v769
    %1085 = vmatpush2.bf16.msra.mxu0 %v768
    %1086 = vmatprep.subr.bf16.mxu0 %v765
    %1087 = vmatpush2.bf16.msra.mxu0 %v764
    %1088 = vmatprep.subr.bf16.mxu0 %v761
    %1089 = vmatpush2.bf16.msra.mxu0 %v760
    %1090 = vmatprep.subr.bf16.mxu0 %v757
    %1091 = vmatpush2.bf16.msra.mxu0 %v756
    %1092 = vmatprep.mubr.bf16.mxu0 %v185
    %1093 = vmatmul.mubr.bf16.gmra.mxu0 %v184
    %v1094 = vpop.f32.mrf.mxu0
    %v1095 = vadd.f32 %v329, %v1094
    %v1096 = vpop.f32.mrf.mxu0
    %v1097 = vadd.f32 %v333, %v1096
    %v1098 = vpop.f32.mrf.mxu0
    %v1099 = vpop.f32.mrf.mxu0
    %1100 = vdwg.mxu0
    %1101 = vmatprep.subr.bf16.mxu0 %v817
    %1102 = vmatpush1.bf16.msra.mxu0 %v816
    %1103 = vmatprep.subr.bf16.mxu0 %v813
    %1104 = vmatpush1.bf16.msra.mxu0 %v812
    %1105 = vmatprep.subr.bf16.mxu0 %v809
    %1106 = vmatpush1.bf16.msra.mxu0 %v808
    %1107 = vmatprep.subr.bf16.mxu0 %v805
    %1108 = vmatpush1.bf16.msra.mxu0 %v804
    %1109 = vmatprep.subr.bf16.mxu0 %v801
    %1110 = vmatpush1.bf16.msra.mxu0 %v800
    %1111 = vmatprep.subr.bf16.mxu0 %v797
    %1112 = vmatpush1.bf16.msra.mxu0 %v796
    %1113 = vmatprep.subr.bf16.mxu0 %v793
    %1114 = vmatpush1.bf16.msra.mxu0 %v792
    %1115 = vmatprep.subr.bf16.mxu0 %v789
    %1116 = vmatpush1.bf16.msra.mxu0 %v788
    %1117 = vmatprep.subr.bf16.mxu0 %v849
    %1118 = vmatpush2.bf16.msra.mxu0 %v848
    %1119 = vmatprep.subr.bf16.mxu0 %v845
    %1120 = vmatpush2.bf16.msra.mxu0 %v844
    %1121 = vmatprep.subr.bf16.mxu0 %v841
    %1122 = vmatpush2.bf16.msra.mxu0 %v840
    %1123 = vmatprep.subr.bf16.mxu0 %v837
    %1124 = vmatpush2.bf16.msra.mxu0 %v836
    %1125 = vmatprep.subr.bf16.mxu0 %v833
    %1126 = vmatpush2.bf16.msra.mxu0 %v832
    %1127 = vmatprep.subr.bf16.mxu0 %v829
    %1128 = vmatpush2.bf16.msra.mxu0 %v828
    %1129 = vmatprep.subr.bf16.mxu0 %v825
    %1130 = vmatpush2.bf16.msra.mxu0 %v824
    %1131 = vmatprep.subr.bf16.mxu0 %v821
    %1132 = vmatpush2.bf16.msra.mxu0 %v820
    %1133 = vmatprep.mubr.bf16.mxu0 %v187
    %1134 = vmatmul.mubr.bf16.gmra.mxu0 %v186
    %v1135 = vpop.f32.mrf.mxu0
    %v1136 = vadd.f32 %v1095, %v1135
    %v1137 = vpop.f32.mrf.mxu0
    %v1138 = vadd.f32 %v1097, %v1137
    %v1139 = vpop.f32.mrf.mxu0
    %v1140 = vpop.f32.mrf.mxu0
    %1141 = vdwg.mxu0
    %v1142 = vmax.f32 %v1054, 0.0
    %v1143 = vmax.f32 %v1056, 0.0
    %v1144 = vmax.f32 %v1136, 0.0
    %v1145 = vmax.f32 %v1138, 0.0
    %v1146 = vpack.c.bf16 %v1142, %v1142
    %v1147 = vpack.c.bf16 %v1143, %v1143
    %v1148 = vpack.c.bf16 %v1144, %v1144
    %v1149 = vpack.c.bf16 %v1145, %v1145
    %v1150 = vld [vmem:[%s6] sm:$0xf]
    %v1151 = vld [vmem:[%s6 + $0x4] sm:$0xf]
    %v1152 = vld [vmem:[%s6 + $0x8] sm:$0xf]
    %v1153 = vld [vmem:[%s6 + $0xc] sm:$0xf]
    %v1154 = vld [vmem:[%s6 + $0x10] sm:$0xf]
    %v1155 = vld [vmem:[%s6 + $0x14] sm:$0xf]
    %v1156 = vld [vmem:[%s6 + $0x18] sm:$0xf]
    %v1157 = vld [vmem:[%s6 + $0x1c] sm:$0xf]
    %v1158 = vld [vmem:[%s6 + $0x20] sm:$0xf]
    %v1159 = vld [vmem:[%s6 + $0x24] sm:$0xf]
    %v1160 = vld [vmem:[%s6 + $0x28] sm:$0xf]
    %v1161 = vld [vmem:[%s6 + $0x2c] sm:$0xf]
    %v1162 = vld [vmem:[%s6 + $0x30] sm:$0xf]
    %v1163 = vld [vmem:[%s6 + $0x34] sm:$0xf]
    %v1164 = vld [vmem:[%s6 + $0x38] sm:$0xf]
    %v1165 = vld [vmem:[%s6 + $0x3c] sm:$0xf]
    %v1166 = vld [vmem:[%s6 + $0x40] sm:$0xf]
    %v1167 = vld [vmem:[%s6 + $0x44] sm:$0xf]
    %v1168 = vld [vmem:[%s6 + $0x48] sm:$0xf]
    %v1169 = vld [vmem:[%s6 + $0x4c] sm:$0xf]
    %v1170 = vld [vmem:[%s6 + $0x50] sm:$0xf]
    %v1171 = vld [vmem:[%s6 + $0x54] sm:$0xf]
    %v1172 = vld [vmem:[%s6 + $0x58] sm:$0xf]
    %v1173 = vld [vmem:[%s6 + $0x5c] sm:$0xf]
    %v1174 = vld [vmem:[%s6 + $0x60] sm:$0xf]
    %v1175 = vld [vmem:[%s6 + $0x64] sm:$0xf]
    %v1176 = vld [vmem:[%s6 + $0x68] sm:$0xf]
    %v1177 = vld [vmem:[%s6 + $0x6c] sm:$0xf]
    %v1178 = vld [vmem:[%s6 + $0x70] sm:$0xf]
    %v1179 = vld [vmem:[%s6 + $0x74] sm:$0xf]
    %v1180 = vld [vmem:[%s6 + $0x78] sm:$0xf]
    %v1181 = vld [vmem:[%s6 + $0x7c] sm:$0xf]
    %v1182 = vld [vmem:[%s6 + $0x80] sm:$0xf]
    %v1183 = vld [vmem:[%s6 + $0x84] sm:$0xf]
    %v1184 = vld [vmem:[%s6 + $0x88] sm:$0xf]
    %v1185 = vld [vmem:[%s6 + $0x8c] sm:$0xf]
    %v1186 = vld [vmem:[%s6 + $0x90] sm:$0xf]
    %v1187 = vld [vmem:[%s6 + $0x94] sm:$0xf]
    %v1188 = vld [vmem:[%s6 + $0x98] sm:$0xf]
    %v1189 = vld [vmem:[%s6 + $0x9c] sm:$0xf]
    %v1190 = vld [vmem:[%s6 + $0xa0] sm:$0xf]
    %v1191 = vld [vmem:[%s6 + $0xa4] sm:$0xf]
    %v1192 = vld [vmem:[%s6 + $0xa8] sm:$0xf]
    %v1193 = vld [vmem:[%s6 + $0xac] sm:$0xf]
    %v1194 = vld [vmem:[%s6 + $0xb0] sm:$0xf]
    %v1195 = vld [vmem:[%s6 + $0xb4] sm:$0xf]
    %v1196 = vld [vmem:[%s6 + $0xb8] sm:$0xf]
    %v1197 = vld [vmem:[%s6 + $0xbc] sm:$0xf]
    %v1198 = vld [vmem:[%s6 + $0xc0] sm:$0xf]
    %v1199 = vld [vmem:[%s6 + $0xc4] sm:$0xf]
    %v1200 = vld [vmem:[%s6 + $0xc8] sm:$0xf]
    %v1201 = vld [vmem:[%s6 + $0xcc] sm:$0xf]
    %v1202 = vld [vmem:[%s6 + $0xd0] sm:$0xf]
    %v1203 = vld [vmem:[%s6 + $0xd4] sm:$0xf]
    %v1204 = vld [vmem:[%s6 + $0xd8] sm:$0xf]
    %v1205 = vld [vmem:[%s6 + $0xdc] sm:$0xf]
    %v1206 = vld [vmem:[%s6 + $0xe0] sm:$0xf]
    %v1207 = vld [vmem:[%s6 + $0xe4] sm:$0xf]
    %v1208 = vld [vmem:[%s6 + $0xe8] sm:$0xf]
    %v1209 = vld [vmem:[%s6 + $0xec] sm:$0xf]
    %v1210 = vld [vmem:[%s6 + $0xf0] sm:$0xf]
    %v1211 = vld [vmem:[%s6 + $0xf4] sm:$0xf]
    %v1212 = vld [vmem:[%s6 + $0xf8] sm:$0xf]
    %v1213 = vld [vmem:[%s6 + $0xfc] sm:$0xf]
    %v1214 = vld [vmem:[%s7] sm:$0x1]
    %v1216 = vlaneseq
    %v1217 = vshrl.u32 %v1216, 7
    %v1218 = vsub.s32 0, %v1217
    %v1219 = vrot.slane %v1214, %v1218
    %v1285 = vunpack.c.l.b16 %v1150
    %v1286 = vunpack.c.l.b16 %v1151
    %v1287 = vunpack.c.l.b16 %v1152
    %v1288 = vunpack.c.l.b16 %v1153
    %v1289 = vunpack.c.l.b16 %v1154
    %v1290 = vunpack.c.l.b16 %v1155
    %v1291 = vunpack.c.l.b16 %v1156
    %v1292 = vunpack.c.l.b16 %v1157
    %v1293 = vunpack.c.l.b16 %v1158
    %v1294 = vunpack.c.l.b16 %v1159
    %v1295 = vunpack.c.l.b16 %v1160
    %v1296 = vunpack.c.l.b16 %v1161
    %v1297 = vunpack.c.l.b16 %v1162
    %v1298 = vunpack.c.l.b16 %v1163
    %v1299 = vunpack.c.l.b16 %v1164
    %v1300 = vunpack.c.l.b16 %v1165
    %v1301 = vunpack.c.l.b16 %v1166
    %v1302 = vunpack.c.l.b16 %v1167
    %v1303 = vunpack.c.l.b16 %v1168
    %v1304 = vunpack.c.l.b16 %v1169
    %v1305 = vunpack.c.l.b16 %v1170
    %v1306 = vunpack.c.l.b16 %v1171
    %v1307 = vunpack.c.l.b16 %v1172
    %v1308 = vunpack.c.l.b16 %v1173
    %v1309 = vunpack.c.l.b16 %v1174
    %v1310 = vunpack.c.l.b16 %v1175
    %v1311 = vunpack.c.l.b16 %v1176
    %v1312 = vunpack.c.l.b16 %v1177
    %v1313 = vunpack.c.l.b16 %v1178
    %v1314 = vunpack.c.l.b16 %v1179
    %v1315 = vunpack.c.l.b16 %v1180
    %v1316 = vunpack.c.l.b16 %v1181
    %v1317 = vunpack.c.l.b16 %v1182
    %v1318 = vunpack.c.l.b16 %v1183
    %v1319 = vunpack.c.l.b16 %v1184
    %v1320 = vunpack.c.l.b16 %v1185
    %v1321 = vunpack.c.l.b16 %v1186
    %v1322 = vunpack.c.l.b16 %v1187
    %v1323 = vunpack.c.l.b16 %v1188
    %v1324 = vunpack.c.l.b16 %v1189
    %v1325 = vunpack.c.l.b16 %v1190
    %v1326 = vunpack.c.l.b16 %v1191
    %v1327 = vunpack.c.l.b16 %v1192
    %v1328 = vunpack.c.l.b16 %v1193
    %v1329 = vunpack.c.l.b16 %v1194
    %v1330 = vunpack.c.l.b16 %v1195
    %v1331 = vunpack.c.l.b16 %v1196
    %v1332 = vunpack.c.l.b16 %v1197
    %v1333 = vunpack.c.l.b16 %v1198
    %v1334 = vunpack.c.l.b16 %v1199
    %v1335 = vunpack.c.l.b16 %v1200
    %v1336 = vunpack.c.l.b16 %v1201
    %v1337 = vunpack.c.l.b16 %v1202
    %v1338 = vunpack.c.l.b16 %v1203
    %v1339 = vunpack.c.l.b16 %v1204
    %v1340 = vunpack.c.l.b16 %v1205
    %v1341 = vunpack.c.l.b16 %v1206
    %v1342 = vunpack.c.l.b16 %v1207
    %v1343 = vunpack.c.l.b16 %v1208
    %v1344 = vunpack.c.l.b16 %v1209
    %v1345 = vunpack.c.l.b16 %v1210
    %v1346 = vunpack.c.l.b16 %v1211
    %v1347 = vunpack.c.l.b16 %v1212
    %v1348 = vunpack.c.l.b16 %v1213
    %v1349 = vpack.c.b16 %v1286, %v1285
    %v1350 = vpack.c.b16 %v1288, %v1287
    %v1351 = vpack.c.b16 %v1290, %v1289
    %v1352 = vpack.c.b16 %v1292, %v1291
    %v1353 = vpack.c.b16 %v1294, %v1293
    %v1354 = vpack.c.b16 %v1296, %v1295
    %v1355 = vpack.c.b16 %v1298, %v1297
    %v1356 = vpack.c.b16 %v1300, %v1299
    %v1357 = vpack.c.b16 %v1302, %v1301
    %v1358 = vpack.c.b16 %v1304, %v1303
    %v1359 = vpack.c.b16 %v1306, %v1305
    %v1360 = vpack.c.b16 %v1308, %v1307
    %v1361 = vpack.c.b16 %v1310, %v1309
    %v1362 = vpack.c.b16 %v1312, %v1311
    %v1363 = vpack.c.b16 %v1314, %v1313
    %v1364 = vpack.c.b16 %v1316, %v1315
    %v1365 = vpack.c.b16 %v1318, %v1317
    %v1366 = vpack.c.b16 %v1320, %v1319
    %v1367 = vpack.c.b16 %v1322, %v1321
    %v1368 = vpack.c.b16 %v1324, %v1323
    %v1369 = vpack.c.b16 %v1326, %v1325
    %v1370 = vpack.c.b16 %v1328, %v1327
    %v1371 = vpack.c.b16 %v1330, %v1329
    %v1372 = vpack.c.b16 %v1332, %v1331
    %v1373 = vpack.c.b16 %v1334, %v1333
    %v1374 = vpack.c.b16 %v1336, %v1335
    %v1375 = vpack.c.b16 %v1338, %v1337
    %v1376 = vpack.c.b16 %v1340, %v1339
    %v1377 = vpack.c.b16 %v1342, %v1341
    %v1378 = vpack.c.b16 %v1344, %v1343
    %v1379 = vpack.c.b16 %v1346, %v1345
    %v1380 = vpack.c.b16 %v1348, %v1347
    %1413 = vmatprep.subr.bf16.mxu0 0
    %1414 = vmatpush1.bf16.msra.mxu0 %v1356
    %1415 = vmatprep.subr.bf16.mxu0 0
    %1416 = vmatpush1.bf16.msra.mxu0 %v1355
    %1417 = vmatprep.subr.bf16.mxu0 0
    %1418 = vmatpush1.bf16.msra.mxu0 %v1354
    %1419 = vmatprep.subr.bf16.mxu0 0
    %1420 = vmatpush1.bf16.msra.mxu0 %v1353
    %1421 = vmatprep.subr.bf16.mxu0 0
    %1422 = vmatpush1.bf16.msra.mxu0 %v1352
    %1423 = vmatprep.subr.bf16.mxu0 0
    %1424 = vmatpush1.bf16.msra.mxu0 %v1351
    %1425 = vmatprep.subr.bf16.mxu0 0
    %1426 = vmatpush1.bf16.msra.mxu0 %v1350
    %1427 = vmatprep.subr.bf16.mxu0 0
    %1428 = vmatpush1.bf16.msra.mxu0 %v1349
    %1429 = vmatprep.subr.bf16.mxu0 0
    %1430 = vmatpush2.bf16.msra.mxu0 %v1364
    %1431 = vmatprep.subr.bf16.mxu0 0
    %1432 = vmatpush2.bf16.msra.mxu0 %v1363
    %1433 = vmatprep.subr.bf16.mxu0 0
    %1434 = vmatpush2.bf16.msra.mxu0 %v1362
    %1435 = vmatprep.subr.bf16.mxu0 0
    %1436 = vmatpush2.bf16.msra.mxu0 %v1361
    %1437 = vmatprep.subr.bf16.mxu0 0
    %1438 = vmatpush2.bf16.msra.mxu0 %v1360
    %1439 = vmatprep.subr.bf16.mxu0 0
    %1440 = vmatpush2.bf16.msra.mxu0 %v1359
    %1441 = vmatprep.subr.bf16.mxu0 0
    %1442 = vmatpush2.bf16.msra.mxu0 %v1358
    %1443 = vmatprep.subr.bf16.mxu0 0
    %1444 = vmatpush2.bf16.msra.mxu0 %v1357
    %1445 = vmatprep.mubr.bf16.mxu0 %v1147
    %1446 = vmatmul.mubr.bf16.gmra.mxu0 %v1146
    %v1447 = vpop.f32.mrf.mxu0
    %v1448 = vadd.f32 %v1219, %v1447
    %v1449 = vpop.f32.mrf.mxu0
    %v1450 = vpop.f32.mrf.mxu0
    %v1451 = vpop.f32.mrf.mxu0
    %1452 = vdwg.mxu0
    %1453 = vmatprep.subr.bf16.mxu0 0
    %1454 = vmatpush1.bf16.msra.mxu0 %v1372
    %1455 = vmatprep.subr.bf16.mxu0 0
    %1456 = vmatpush1.bf16.msra.mxu0 %v1371
    %1457 = vmatprep.subr.bf16.mxu0 0
    %1458 = vmatpush1.bf16.msra.mxu0 %v1370
    %1459 = vmatprep.subr.bf16.mxu0 0
    %1460 = vmatpush1.bf16.msra.mxu0 %v1369
    %1461 = vmatprep.subr.bf16.mxu0 0
    %1462 = vmatpush1.bf16.msra.mxu0 %v1368
    %1463 = vmatprep.subr.bf16.mxu0 0
    %1464 = vmatpush1.bf16.msra.mxu0 %v1367
    %1465 = vmatprep.subr.bf16.mxu0 0
    %1466 = vmatpush1.bf16.msra.mxu0 %v1366
    %1467 = vmatprep.subr.bf16.mxu0 0
    %1468 = vmatpush1.bf16.msra.mxu0 %v1365
    %1469 = vmatprep.subr.bf16.mxu0 0
    %1470 = vmatpush2.bf16.msra.mxu0 %v1380
    %1471 = vmatprep.subr.bf16.mxu0 0
    %1472 = vmatpush2.bf16.msra.mxu0 %v1379
    %1473 = vmatprep.subr.bf16.mxu0 0
    %1474 = vmatpush2.bf16.msra.mxu0 %v1378
    %1475 = vmatprep.subr.bf16.mxu0 0
    %1476 = vmatpush2.bf16.msra.mxu0 %v1377
    %1477 = vmatprep.subr.bf16.mxu0 0
    %1478 = vmatpush2.bf16.msra.mxu0 %v1376
    %1479 = vmatprep.subr.bf16.mxu0 0
    %1480 = vmatpush2.bf16.msra.mxu0 %v1375
    %1481 = vmatprep.subr.bf16.mxu0 0
    %1482 = vmatpush2.bf16.msra.mxu0 %v1374
    %1483 = vmatprep.subr.bf16.mxu0 0
    %1484 = vmatpush2.bf16.msra.mxu0 %v1373
    %1485 = vmatprep.mubr.bf16.mxu0 %v1149
    %1486 = vmatmul.mubr.bf16.gmra.mxu0 %v1148
    %v1487 = vpop.f32.mrf.mxu0
    %v1488 = vadd.f32 %v1448, %v1487
    %v1489 = vpop.f32.mrf.mxu0
    %v1490 = vpop.f32.mrf.mxu0
    %v1491 = vpop.f32.mrf.mxu0
    %1492 = vdwg.mxu0
    %s1493 = sld [smem:[#allocation2]]
    %v1494 = vtanh.pop %v1488
    %v1495 = vstv %s1493
    %v1496 = vmul.f32 %v1495, %v1494
    %vm1497 = vcmask 64512
    %1498 = vst.msk [vmem:[#allocation6] sm:$0xff] %vm1497, %v1496
    // Predicated region
    $region38: #{tpu_custom_call.1} parent=1 // pred_check
      _
    $region39: #{tpu_custom_call.1} parent=1 // pred_check_branch
      %1500 = sbr.rel (0) target = $region41
    $region40: #{tpu_custom_call.1} parent=1 // pred_region
      %s1502 = ssub.s32 128, 128
      %1503 = vsyncadd [#allocation5], %s1502
      %s1505 = sshll.u32 [#allocation6], 4
      %s1506 = int_to_ptr.vmem [resolvable:$true] %s1505
      %1508 = dma.vmem_to_hbm [thread:$0]  %s1506, 128, %s8, [#allocation5]
    $region41: #{tpu_custom_call.1} parent=1 // pred_fallthru
      _
    // Predicated region
    $region42: #{tpu_custom_call.1} parent=1 // pred_check
      _
    $region43: #{tpu_custom_call.1} parent=1 // pred_check_branch
      %1510 = sbr.rel (0) target = $region45
    $region44: #{tpu_custom_call.1} parent=1 // pred_region
      %1511 = dma.done [#allocation5], 128
    $region45: #{tpu_custom_call.1} parent=1 // pred_fallthru
      _
    %1512 = vsyncpa [#allocation4], 1
    %1513 = vsyncpa [#allocation5], 1

</llo_original>
